<compile_context>
chip_gen: v7x
topology: tpu7x:2x2x1
jax: 0.10.0
libtpu: 0.0.40
codegen_flags: <defaults>
</compile_context>

<pallas_src>
import functools

import jax
import jax.numpy as jnp
from jax.experimental import pallas as pl
from jax.experimental.pallas import tpu as pltpu


# -----------------------------------------------------------------------------
# Kernel: fused MLP (all Linear+ReLU layers in one body).
# -----------------------------------------------------------------------------
def _fused_mlp_kernel(n_layers, matmul_dtype, *refs):
    """refs = (x_ref, w0_ref, b0_ref, w1_ref, b1_ref, ..., o_ref).

    Weights are stored (in_features, out_features) -- pre-transposed and
    (optionally) pre-cast to matmul_dtype at prep time.  Biases are f32
    (1, out_features).  Accumulation is f32 on the MXU; bias-add + ReLU run in
    f32 on the VPU; only the lhs of the NEXT matmul is down-cast.
    """
    x_ref = refs[0]
    o_ref = refs[-1]
    param_refs = refs[1:-1]

    x = x_ref[...]
    if matmul_dtype is not None:
        if x.dtype != matmul_dtype:
            x = x.astype(matmul_dtype)          # single cast, no f32 round-trip
    else:
        x = x.astype(jnp.float32)

    for layer in range(n_layers):
        w = param_refs[2 * layer][...]
        b = param_refs[2 * layer + 1][...]      # f32 (1, N), broadcasts over rows
        if matmul_dtype is not None and w.dtype != matmul_dtype:
            w = w.astype(matmul_dtype)          # no-op when weights were pre-cast
        y = jnp.dot(x, w, preferred_element_type=jnp.float32)   # f32 accumulate
        act = jnp.maximum(y + b, 0.0)           # f32 VPU epilogue (v5e-safe)
        if matmul_dtype is not None and layer < n_layers - 1:
            x = act.astype(matmul_dtype)        # lhs of next matmul only
        else:
            x = act                             # last layer stays f32 for store

    o_ref[...] = x.astype(o_ref.dtype)


# -----------------------------------------------------------------------------
# Parameter helpers.
# -----------------------------------------------------------------------------
def init_autoencoder_params(key, input_dim, latent_dim,
                            encoder_hidden_dims=None, decoder_hidden_dims=None,
                            dtype=jnp.float32):
    """Synthetic parameters matching nn.Linear shapes: W=(out, in), b=(out,)."""
    enc_dims = []
    if encoder_hidden_dims is not None:
        prev = input_dim
        for d in encoder_hidden_dims:
            enc_dims.append((prev, d))
            prev = d
        enc_dims.append((prev, latent_dim))
    else:
        enc_dims.append((input_dim, latent_dim))

    if decoder_hidden_dims is None and encoder_hidden_dims is not None:
        decoder_hidden_dims = list(reversed(encoder_hidden_dims))

    dec_dims = []
    if decoder_hidden_dims is not None:
        prev = latent_dim
        for d in decoder_hidden_dims:
            dec_dims.append((prev, d))
            prev = d
        dec_dims.append((prev, input_dim))
    else:
        dec_dims.append((latent_dim, input_dim))

    params = []
    for (fan_in, fan_out) in enc_dims + dec_dims:
        key, kw, kb = jax.random.split(key, 3)
        bound = 1.0 / jnp.sqrt(fan_in)
        w = jax.random.uniform(kw, (fan_out, fan_in), dtype, -bound, bound)
        b = jax.random.uniform(kb, (fan_out,), dtype, -bound, bound)
        params.append((w, b))
    n_enc = len(enc_dims)
    return params[:n_enc], params[n_enc:]


def prepare_params(encoder_params, decoder_params, *, pad_to=128,
                   weight_dtype=jnp.bfloat16):
    """One-time prep: transpose W to (in, out), cast W to weight_dtype, keep b
    as f32 (1, out), and zero-pad every *intermediate* feature dim up to a
    multiple of `pad_to` lanes.  ReLU(0 + 0) == 0, so padded columns stay zero
    and contribute nothing downstream => numerically identical to the unpadded
    model.  The final layer's output dim is never padded, so the output shape
    matches the reference exactly."""
    layers = list(encoder_params) + list(decoder_params)
    n = len(layers)
    prepped = []
    in_pad = 0  # padding carried over from the previous layer's output dim
    for idx, (w, b) in enumerate(layers):
        out_f, _ = w.shape
        w_t = jnp.transpose(w)                                  # (in, out)
        if in_pad:
            w_t = jnp.pad(w_t, ((0, in_pad), (0, 0)))           # zero input rows
        out_pad = ((-out_f) % pad_to) if idx < n - 1 else 0
        if out_pad:
            w_t = jnp.pad(w_t, ((0, 0), (0, out_pad)))          # zero output cols
            b = jnp.pad(b, (0, out_pad))
        if weight_dtype is not None:
            w_t = w_t.astype(weight_dtype)
        prepped.append((w_t, b.astype(jnp.float32).reshape(1, -1)))
        in_pad = out_pad
    return prepped


def _pick_batch_tile(M, cap=512):
    """Batch tile: whole batch when small, otherwise a multiple-of-8 cap that
    keeps the tile well inside v7x's 64 MiB VMEM while staying DMA-pipelined."""
    if M <= cap:
        return M
    return cap  # cap is a multiple of 8


# -----------------------------------------------------------------------------
# Forward pass: a single pallas_call; weights VMEM-resident, batch tiled.
# -----------------------------------------------------------------------------
@functools.partial(jax.jit, static_argnames=("matmul_dtype", "tile_m"))
def autoencoder_forward(x, prepped_params, *, matmul_dtype=jnp.bfloat16,
                        tile_m=512):
    """x: (batch, input_dim); prepped_params: list of (W_t, b) from prepare_params."""
    M, in_dim = x.shape
    n_layers = len(prepped_params)
    flat_params = []
    for w_t, b in prepped_params:
        flat_params.extend([w_t, b])
    out_dim = prepped_params[-1][0].shape[1]

    tm = _pick_batch_tile(M, cap=tile_m)
    num_tiles = pl.cdiv(M, tm)

    kernel = functools.partial(_fused_mlp_kernel, n_layers, matmul_dtype)

    # x / out are batch-tiled; weights & biases keep a constant index_map so
    # Pallas keeps them VMEM-resident (no re-DMA across grid steps).
    in_specs = [pl.BlockSpec((tm, in_dim), lambda i: (i, 0))]
    for a in flat_params:
        in_specs.append(pl.BlockSpec(a.shape, lambda i: (0, 0)))
    out_specs = pl.BlockSpec((tm, out_dim), lambda i: (i, 0))

    # Right-size the scoped VMEM request: real footprint with 2x headroom,
    # instead of requesting all of a v7x TensorCore's 64 MiB.
    param_bytes = sum(int(a.size) * a.dtype.itemsize for a in flat_params)
    io_bytes = 2 * (tm * in_dim * x.dtype.itemsize            # double-buffered in
                    + tm * out_dim * x.dtype.itemsize)        # double-buffered out
    max_width = max(w.shape[1] for w, _ in prepped_params)
    act_bytes = 4 * tm * max_width * 4                        # f32 working set
    vmem_limit = int(min(96 * 1024 * 1024,
                         max(4 * 1024 * 1024,
                             2 * (param_bytes + io_bytes + act_bytes))))

    return pl.pallas_call(
        kernel,
        out_shape=jax.ShapeDtypeStruct((M, out_dim), x.dtype),
        grid_spec=pltpu.PrefetchScalarGridSpec(
            num_scalar_prefetch=0,
            grid=(num_tiles,),
            in_specs=in_specs,
            out_specs=out_specs,
        ),
        compiler_params=pltpu.CompilerParams(
            dimension_semantics=("parallel",),   # batch tiles are independent (v7x 2-TC win)
            vmem_limit_bytes=vmem_limit,
        ),
    )(x, *flat_params)


# -----------------------------------------------------------------------------
# Pure-JAX reference (mirrors the PyTorch forward on the ORIGINAL params).
# -----------------------------------------------------------------------------
def _reference_forward(x, encoder_params, decoder_params):
    for (w, b) in list(encoder_params) + list(decoder_params):
        x = jnp.maximum(x @ w.T + b, 0.0)
    return x


if __name__ == "__main__":
    key = jax.random.PRNGKey(0)
    key, kx, kp = jax.random.split(key, 3)

    batch = 16
    input_dim = 256
    latent_dim = 64          # gets lane-padded to 128 internally (no effect on results)
    encoder_hidden_dims = [128]

    enc_params, dec_params = init_autoencoder_params(
        kp, input_dim, latent_dim, encoder_hidden_dims)

    x = jax.random.normal(kx, (batch, input_dim), jnp.float32)
    ref = _reference_forward(x, enc_params, dec_params)

    # --- Default bf16 MXU path (v5e/v6e/v7x native rate, f32 accumulation) ---
    prepped_bf16 = prepare_params(enc_params, dec_params, pad_to=128,
                                  weight_dtype=jnp.bfloat16)
    out_bf16 = autoencoder_forward(x, prepped_bf16)            # matmul_dtype=bf16 default
    out_bf16 = jax.block_until_ready(out_bf16)
    assert out_bf16.shape == (batch, input_dim), out_bf16.shape
    # bf16 inputs to the MXU => relaxed (but tight-for-bf16) tolerance.
    assert jnp.allclose(out_bf16, ref, atol=5e-2, rtol=5e-2)

    # --- Exact f32 path (sanity: bit-level match of the fused/padded layout) ---
    prepped_f32 = prepare_params(enc_params, dec_params, pad_to=128,
                                 weight_dtype=None)
    out_f32 = autoencoder_forward(x, prepped_f32, matmul_dtype=None)
    out_f32 = jax.block_until_ready(out_f32)
    assert out_f32.shape == (batch, input_dim), out_f32.shape
    assert jnp.allclose(out_f32, ref, atol=1e-5, rtol=1e-5)

    print("KERNEL_OK")
</pallas_src>

<mosaic_0001>
module attributes {stable_mosaic.version = 11 : i64} {
  func.func @_fused_mlp_kernel(%arg0: i32, %arg1: memref<16x256xf32, #tpu.memory_space<vmem>>, %arg2: memref<256x128xbf16, #tpu.memory_space<vmem>>, %arg3: memref<1x128xf32, #tpu.memory_space<vmem>>, %arg4: memref<128x128xbf16, #tpu.memory_space<vmem>>, %arg5: memref<1x128xf32, #tpu.memory_space<vmem>>, %arg6: memref<128x128xbf16, #tpu.memory_space<vmem>>, %arg7: memref<1x128xf32, #tpu.memory_space<vmem>>, %arg8: memref<128x256xbf16, #tpu.memory_space<vmem>>, %arg9: memref<1x256xf32, #tpu.memory_space<vmem>>, %arg10: memref<16x256xf32, #tpu.memory_space<vmem>>) attributes {dimension_semantics = [#tpu.dimension_semantics<parallel>], iteration_bounds = array<i64: 1>, scalar_prefetch = 0 : i64, scratch_operands = 0 : i64, tpu.core_type = #tpu.core_type<tc>, window_params = [{transform_indices = @transform_0, window_bounds = array<i64: 16, 256>}, {pipeline_mode = #tpu.pipeline_mode<synchronous>, transform_indices = @transform_1, window_bounds = array<i64: 256, 128>}, {pipeline_mode = #tpu.pipeline_mode<synchronous>, transform_indices = @transform_2, window_bounds = array<i64: 1, 128>}, {pipeline_mode = #tpu.pipeline_mode<synchronous>, transform_indices = @transform_3, window_bounds = array<i64: 128, 128>}, {pipeline_mode = #tpu.pipeline_mode<synchronous>, transform_indices = @transform_4, window_bounds = array<i64: 1, 128>}, {pipeline_mode = #tpu.pipeline_mode<synchronous>, transform_indices = @transform_5, window_bounds = array<i64: 128, 128>}, {pipeline_mode = #tpu.pipeline_mode<synchronous>, transform_indices = @transform_6, window_bounds = array<i64: 1, 128>}, {pipeline_mode = #tpu.pipeline_mode<synchronous>, transform_indices = @transform_7, window_bounds = array<i64: 128, 256>}, {pipeline_mode = #tpu.pipeline_mode<synchronous>, transform_indices = @transform_8, window_bounds = array<i64: 1, 256>}, {transform_indices = @transform_9, window_bounds = array<i64: 16, 256>}]} {
    %c0 = arith.constant 0 : index
    %c0_0 = arith.constant 0 : index
    %0 = vector.load %arg1[%c0, %c0_0] : memref<16x256xf32, #tpu.memory_space<vmem>>, vector<16x256xf32>
    %1 = arith.truncf %0 : vector<16x256xf32> to vector<16x256xbf16>
    %c0_1 = arith.constant 0 : index
    %c0_2 = arith.constant 0 : index
    %2 = vector.load %arg2[%c0_1, %c0_2] : memref<256x128xbf16, #tpu.memory_space<vmem>>, vector<256x128xbf16>
    %c0_3 = arith.constant 0 : index
    %c0_4 = arith.constant 0 : index
    %3 = vector.load %arg3[%c0_3, %c0_4] : memref<1x128xf32, #tpu.memory_space<vmem>>, vector<1x128xf32>
    %cst = arith.constant dense<0.000000e+00> : vector<16x128xf32>
    %4 = tpu.matmul %1, %2, %cst {dimension_numbers = #tpu.dot_dimension_numbers<[1], [0], [0], [1], [0, 0, 1, 1], [], []>} : vector<16x256xbf16>, vector<256x128xbf16>, vector<16x128xf32> -> vector<16x128xf32>
    %5 = vector.broadcast %3 : vector<1x128xf32> to vector<16x128xf32>
    %6 = arith.addf %4, %5 : vector<16x128xf32>
    %cst_5 = arith.constant 0.000000e+00 : f32
    %7 = vector.broadcast %cst_5 : f32 to vector<16x128xf32>
    %8 = arith.maximumf %6, %7 : vector<16x128xf32>
    %9 = arith.truncf %8 : vector<16x128xf32> to vector<16x128xbf16>
    %c0_6 = arith.constant 0 : index
    %c0_7 = arith.constant 0 : index
    %10 = vector.load %arg4[%c0_6, %c0_7] : memref<128x128xbf16, #tpu.memory_space<vmem>>, vector<128x128xbf16>
    %c0_8 = arith.constant 0 : index
    %c0_9 = arith.constant 0 : index
    %11 = vector.load %arg5[%c0_8, %c0_9] : memref<1x128xf32, #tpu.memory_space<vmem>>, vector<1x128xf32>
    %cst_10 = arith.constant dense<0.000000e+00> : vector<16x128xf32>
    %12 = tpu.matmul %9, %10, %cst_10 {dimension_numbers = #tpu.dot_dimension_numbers<[1], [0], [0], [1], [0, 0, 1, 1], [], []>} : vector<16x128xbf16>, vector<128x128xbf16>, vector<16x128xf32> -> vector<16x128xf32>
    %13 = vector.broadcast %11 : vector<1x128xf32> to vector<16x128xf32>
    %14 = arith.addf %12, %13 : vector<16x128xf32>
    %cst_11 = arith.constant 0.000000e+00 : f32
    %15 = vector.broadcast %cst_11 : f32 to vector<16x128xf32>
    %16 = arith.maximumf %14, %15 : vector<16x128xf32>
    %17 = arith.truncf %16 : vector<16x128xf32> to vector<16x128xbf16>
    %c0_12 = arith.constant 0 : index
    %c0_13 = arith.constant 0 : index
    %18 = vector.load %arg6[%c0_12, %c0_13] : memref<128x128xbf16, #tpu.memory_space<vmem>>, vector<128x128xbf16>
    %c0_14 = arith.constant 0 : index
    %c0_15 = arith.constant 0 : index
    %19 = vector.load %arg7[%c0_14, %c0_15] : memref<1x128xf32, #tpu.memory_space<vmem>>, vector<1x128xf32>
    %cst_16 = arith.constant dense<0.000000e+00> : vector<16x128xf32>
    %20 = tpu.matmul %17, %18, %cst_16 {dimension_numbers = #tpu.dot_dimension_numbers<[1], [0], [0], [1], [0, 0, 1, 1], [], []>} : vector<16x128xbf16>, vector<128x128xbf16>, vector<16x128xf32> -> vector<16x128xf32>
    %21 = vector.broadcast %19 : vector<1x128xf32> to vector<16x128xf32>
    %22 = arith.addf %20, %21 : vector<16x128xf32>
    %cst_17 = arith.constant 0.000000e+00 : f32
    %23 = vector.broadcast %cst_17 : f32 to vector<16x128xf32>
    %24 = arith.maximumf %22, %23 : vector<16x128xf32>
    %25 = arith.truncf %24 : vector<16x128xf32> to vector<16x128xbf16>
    %c0_18 = arith.constant 0 : index
    %c0_19 = arith.constant 0 : index
    %26 = vector.load %arg8[%c0_18, %c0_19] : memref<128x256xbf16, #tpu.memory_space<vmem>>, vector<128x256xbf16>
    %c0_20 = arith.constant 0 : index
    %c0_21 = arith.constant 0 : index
    %27 = vector.load %arg9[%c0_20, %c0_21] : memref<1x256xf32, #tpu.memory_space<vmem>>, vector<1x256xf32>
    %cst_22 = arith.constant dense<0.000000e+00> : vector<16x256xf32>
    %28 = tpu.matmul %25, %26, %cst_22 {dimension_numbers = #tpu.dot_dimension_numbers<[1], [0], [0], [1], [0, 0, 1, 1], [], []>} : vector<16x128xbf16>, vector<128x256xbf16>, vector<16x256xf32> -> vector<16x256xf32>
    %29 = vector.broadcast %27 : vector<1x256xf32> to vector<16x256xf32>
    %30 = arith.addf %28, %29 : vector<16x256xf32>
    %cst_23 = arith.constant 0.000000e+00 : f32
    %31 = vector.broadcast %cst_23 : f32 to vector<16x256xf32>
    %32 = arith.maximumf %30, %31 : vector<16x256xf32>
    %c0_24 = arith.constant 0 : index
    %c0_25 = arith.constant 0 : index
    %33 = vector.load %arg10[%c0_24, %c0_25] : memref<16x256xf32, #tpu.memory_space<vmem>>, vector<16x256xf32>
    tpu.vector_store %arg10[%c0_24, %c0_25], %32 {strides = array<i32>} : memref<16x256xf32, #tpu.memory_space<vmem>>, vector<16x256xf32>,
    return
  }
  func.func @transform_0(%arg0: i32) -> (i32, i32) {
    %c0_i32 = arith.constant 0 : i32
    %c0_i32_0 = arith.constant 0 : i32
    return %arg0, %c0_i32 : i32, i32
  }
  func.func @transform_1(%arg0: i32) -> (i32, i32) {
    %c0_i32 = arith.constant 0 : i32
    %c0_i32_0 = arith.constant 0 : i32
    %c0_i32_1 = arith.constant 0 : i32
    return %c0_i32, %c0_i32_0 : i32, i32
  }
  func.func @transform_2(%arg0: i32) -> (i32, i32) {
    %c0_i32 = arith.constant 0 : i32
    %c0_i32_0 = arith.constant 0 : i32
    %c0_i32_1 = arith.constant 0 : i32
    return %c0_i32, %c0_i32_0 : i32, i32
  }
  func.func @transform_3(%arg0: i32) -> (i32, i32) {
    %c0_i32 = arith.constant 0 : i32
    %c0_i32_0 = arith.constant 0 : i32
    %c0_i32_1 = arith.constant 0 : i32
    return %c0_i32, %c0_i32_0 : i32, i32
  }
  func.func @transform_4(%arg0: i32) -> (i32, i32) {
    %c0_i32 = arith.constant 0 : i32
    %c0_i32_0 = arith.constant 0 : i32
    %c0_i32_1 = arith.constant 0 : i32
    return %c0_i32, %c0_i32_0 : i32, i32
  }
  func.func @transform_5(%arg0: i32) -> (i32, i32) {
    %c0_i32 = arith.constant 0 : i32
    %c0_i32_0 = arith.constant 0 : i32
    %c0_i32_1 = arith.constant 0 : i32
    return %c0_i32, %c0_i32_0 : i32, i32
  }
  func.func @transform_6(%arg0: i32) -> (i32, i32) {
    %c0_i32 = arith.constant 0 : i32
    %c0_i32_0 = arith.constant 0 : i32
    %c0_i32_1 = arith.constant 0 : i32
    return %c0_i32, %c0_i32_0 : i32, i32
  }
  func.func @transform_7(%arg0: i32) -> (i32, i32) {
    %c0_i32 = arith.constant 0 : i32
    %c0_i32_0 = arith.constant 0 : i32
    %c0_i32_1 = arith.constant 0 : i32
    return %c0_i32, %c0_i32_0 : i32, i32
  }
  func.func @transform_8(%arg0: i32) -> (i32, i32) {
    %c0_i32 = arith.constant 0 : i32
    %c0_i32_0 = arith.constant 0 : i32
    %c0_i32_1 = arith.constant 0 : i32
    return %c0_i32, %c0_i32_0 : i32, i32
  }
  func.func @transform_9(%arg0: i32) -> (i32, i32) {
    %c0_i32 = arith.constant 0 : i32
    %c0_i32_0 = arith.constant 0 : i32
    return %arg0, %c0_i32 : i32, i32
  }
}

</mosaic_0001>

<llo_original>
// kernel: autoencoder_forward.1
$region0: #{autoencoder_forward.1}
  #allocation0 [shape = 'u32[]', space=smem, size = 0x4, offset = 0x4, fixed_abs, tag = 'smem constant byte address 0x4 - core index']
  #allocation1 [shape = 'u32[144,128]{1,0:T(1,128)}', space=vmem, size = 0x12000, scoped, tag = 'internal scratch']
  %s0 = inlined_call_operand.hbm [shape: f32[16,256], index: 0, kind: input, shape index: {}]
  %s1 = inlined_call_operand.hbm [shape: bf16[256,128], index: 1, kind: input, shape index: {}]
  %s2 = inlined_call_operand.vmem [shape: f32[1,128], index: 2, kind: input, shape index: {}]
  %s3 = inlined_call_operand.hbm [shape: bf16[128,128], index: 3, kind: input, shape index: {}]
  %s4 = inlined_call_operand.vmem [shape: f32[1,128], index: 4, kind: input, shape index: {}]
  %s5 = inlined_call_operand.hbm [shape: bf16[128,128], index: 5, kind: input, shape index: {}]
  %s6 = inlined_call_operand.vmem [shape: f32[1,128], index: 6, kind: input, shape index: {}]
  %s7 = inlined_call_operand.hbm [shape: bf16[128,256], index: 7, kind: input, shape index: {}]
  %s8 = inlined_call_operand.vmem [shape: f32[1,256], index: 8, kind: input, shape index: {}]
  %s9 = inlined_call_operand.hbm [shape: f32[16,256], index: 9, kind: output, shape index: {}]
  %s10 = sld [smem:[#allocation0]]
  $region66: #{autoencoder_forward.1} parent=0
    _
  %s12 = ssub.s32 1, %s10
  %s13 = scalar_select 0, %s12, %s10
  $region1: #{autoencoder_forward.1} parent=0
    #allocation2 [shape = 'u8[16384]{0}', space=vmem, size = 0x4000, scoped, tag = 'input window, operand 0, single buffered']
    #allocation3 [shape = 's32[1]{0}', space=sflag, size = 0x4, scoped, tag = 'scoped memory for autoencoder_forward.1']
    #allocation4 [shape = 's32[1]{0}', space=sflag, size = 0x4, scoped, tag = 'scoped memory for autoencoder_forward.1']
    #allocation5 [shape = 'u8[65536]{0}', space=vmem, size = 0x10000, scoped, tag = 'input window, operand 1, single buffered']
    #allocation6 [shape = 's32[1]{0}', space=sflag, size = 0x4, scoped, tag = 'scoped memory for autoencoder_forward.1']
    #allocation7 [shape = 'u8[32768]{0}', space=vmem, size = 0x8000, scoped, tag = 'input window, operand 3, single buffered']
    #allocation8 [shape = 'u8[32768]{0}', space=vmem, size = 0x8000, scoped, tag = 'input window, operand 5, single buffered']
    #allocation9 [shape = 's32[1]{0}', space=sflag, size = 0x4, scoped, tag = 'scoped memory for autoencoder_forward.1']
    #allocation10 [shape = 'u8[65536]{0}', space=vmem, size = 0x10000, scoped, tag = 'input window, operand 7, single buffered']
    #allocation11 [shape = 'u8[16384]{0}', space=vmem, size = 0x4000, scoped, tag = 'output window, operand 0, single buffered']
    %14 = vsyncpa [#allocation3], 0
    %15 = vsyncpa [#allocation6], 0
    %16 = vsyncpa [#allocation9], 0
    %17 = vsyncpa [#allocation4], 0
    // Predicated region
    $region2: #{autoencoder_forward.1} parent=1 // pred_check
      _
    $region3: #{autoencoder_forward.1} parent=1 // pred_check_branch
      %19 = sbr.rel (0) target = $region5
    $region4: #{autoencoder_forward.1} parent=1 // pred_region
      %s21 = ssub.s32 512, 512
      %22 = vsyncadd [#allocation3], %s21
      %s23 = sshll.u32 [#allocation2], 4
      %s24 = int_to_ptr.vmem [resolvable:$true] %s23
      %29 = dma.hbm_to_vmem [thread:$0]  %s0, 512, %s24, [#allocation3], 256, 256, 16
    $region5: #{autoencoder_forward.1} parent=1 // pred_fallthru
      _
    // Predicated region
    $region6: #{autoencoder_forward.1} parent=1 // pred_check
      _
    $region7: #{autoencoder_forward.1} parent=1 // pred_check_branch
      %31 = sbr.rel (0) target = $region9
    $region8: #{autoencoder_forward.1} parent=1 // pred_region
      %s33 = ssub.s32 2048, 2048
      %34 = vsyncadd [#allocation6], %s33
      %s35 = sshll.u32 [#allocation5], 4
      %s36 = int_to_ptr.vmem [resolvable:$true] %s35
      %41 = dma.hbm_to_vmem [thread:$0]  %s1, 2048, %s36, [#allocation6], 64, 64, 4
    $region9: #{autoencoder_forward.1} parent=1 // pred_fallthru
      _
    // Predicated region
    $region10: #{autoencoder_forward.1} parent=1 // pred_check
      _
    $region11: #{autoencoder_forward.1} parent=1 // pred_check_branch
      %43 = sbr.rel (0) target = $region13
    $region12: #{autoencoder_forward.1} parent=1 // pred_region
      _
    $region13: #{autoencoder_forward.1} parent=1 // pred_fallthru
      _
    // Predicated region
    $region14: #{autoencoder_forward.1} parent=1 // pred_check
      _
    $region15: #{autoencoder_forward.1} parent=1 // pred_check_branch
      %45 = sbr.rel (0) target = $region17
    $region16: #{autoencoder_forward.1} parent=1 // pred_region
      %s47 = ssub.s32 1024, 1024
      %48 = vsyncadd [#allocation6], %s47
      %s49 = sshll.u32 [#allocation7], 4
      %s50 = int_to_ptr.vmem [resolvable:$true] %s49
      %55 = dma.hbm_to_vmem [thread:$0]  %s3, 1024, %s50, [#allocation6], 64, 64, 4
    $region17: #{autoencoder_forward.1} parent=1 // pred_fallthru
      _
    // Predicated region
    $region18: #{autoencoder_forward.1} parent=1 // pred_check
      _
    $region19: #{autoencoder_forward.1} parent=1 // pred_check_branch
      %57 = sbr.rel (0) target = $region21
    $region20: #{autoencoder_forward.1} parent=1 // pred_region
      _
    $region21: #{autoencoder_forward.1} parent=1 // pred_fallthru
      _
    // Predicated region
    $region22: #{autoencoder_forward.1} parent=1 // pred_check
      _
    $region23: #{autoencoder_forward.1} parent=1 // pred_check_branch
      %59 = sbr.rel (0) target = $region25
    $region24: #{autoencoder_forward.1} parent=1 // pred_region
      %s61 = ssub.s32 1024, 1024
      %62 = vsyncadd [#allocation9], %s61
      %s63 = sshll.u32 [#allocation8], 4
      %s64 = int_to_ptr.vmem [resolvable:$true] %s63
      %69 = dma.hbm_to_vmem [thread:$0]  %s5, 1024, %s64, [#allocation9], 64, 64, 4
    $region25: #{autoencoder_forward.1} parent=1 // pred_fallthru
      _
    // Predicated region
    $region26: #{autoencoder_forward.1} parent=1 // pred_check
      _
    $region27: #{autoencoder_forward.1} parent=1 // pred_check_branch
      %71 = sbr.rel (0) target = $region29
    $region28: #{autoencoder_forward.1} parent=1 // pred_region
      _
    $region29: #{autoencoder_forward.1} parent=1 // pred_fallthru
      _
    // Predicated region
    $region30: #{autoencoder_forward.1} parent=1 // pred_check
      _
    $region31: #{autoencoder_forward.1} parent=1 // pred_check_branch
      %73 = sbr.rel (0) target = $region33
    $region32: #{autoencoder_forward.1} parent=1 // pred_region
      %s75 = ssub.s32 2048, 2048
      %76 = vsyncadd [#allocation9], %s75
      %s77 = sshll.u32 [#allocation10], 4
      %s78 = int_to_ptr.vmem [resolvable:$true] %s77
      %83 = dma.hbm_to_vmem [thread:$0]  %s7, 2048, %s78, [#allocation9], 128, 128, 8
    $region33: #{autoencoder_forward.1} parent=1 // pred_fallthru
      _
    // Predicated region
    $region34: #{autoencoder_forward.1} parent=1 // pred_check
      _
    $region35: #{autoencoder_forward.1} parent=1 // pred_check_branch
      %85 = sbr.rel (0) target = $region37
    $region36: #{autoencoder_forward.1} parent=1 // pred_region
      _
    $region37: #{autoencoder_forward.1} parent=1 // pred_fallthru
      _
    // Predicated region
    $region38: #{autoencoder_forward.1} parent=1 // pred_check
      _
    $region39: #{autoencoder_forward.1} parent=1 // pred_check_branch
      %87 = sbr.rel (0) target = $region41
    $region40: #{autoencoder_forward.1} parent=1 // pred_region
      %88 = dma.done [#allocation3], 512
    $region41: #{autoencoder_forward.1} parent=1 // pred_fallthru
      _
    // Predicated region
    $region42: #{autoencoder_forward.1} parent=1 // pred_check
      _
    $region43: #{autoencoder_forward.1} parent=1 // pred_check_branch
      %90 = sbr.rel (0) target = $region45
    $region44: #{autoencoder_forward.1} parent=1 // pred_region
      %91 = dma.done [#allocation6], 2048
    $region45: #{autoencoder_forward.1} parent=1 // pred_fallthru
      _
    // Predicated region
    $region46: #{autoencoder_forward.1} parent=1 // pred_check
      _
    $region47: #{autoencoder_forward.1} parent=1 // pred_check_branch
      %93 = sbr.rel (0) target = $region49
    $region48: #{autoencoder_forward.1} parent=1 // pred_region
      %94 = dma.done [#allocation6], 1024
    $region49: #{autoencoder_forward.1} parent=1 // pred_fallthru
      _
    // Predicated region
    $region50: #{autoencoder_forward.1} parent=1 // pred_check
      _
    $region51: #{autoencoder_forward.1} parent=1 // pred_check_branch
      %96 = sbr.rel (0) target = $region53
    $region52: #{autoencoder_forward.1} parent=1 // pred_region
      %97 = dma.done [#allocation9], 1024
    $region53: #{autoencoder_forward.1} parent=1 // pred_fallthru
      _
    // Predicated region
    $region54: #{autoencoder_forward.1} parent=1 // pred_check
      _
    $region55: #{autoencoder_forward.1} parent=1 // pred_check_branch
      %99 = sbr.rel (0) target = $region57
    $region56: #{autoencoder_forward.1} parent=1 // pred_region
      %100 = dma.done [#allocation9], 2048
    $region57: #{autoencoder_forward.1} parent=1 // pred_fallthru
      _
    %v102 = vld [vmem:[#allocation2] sm:$0xff]
    %v103 = vld [vmem:[#allocation2 + $0x8] sm:$0xff]
    %v104 = vld [vmem:[#allocation2 + $0x10] sm:$0xff]
    %v105 = vld [vmem:[#allocation2 + $0x18] sm:$0xff]
    %v106 = vpack.c.bf16 %v104, %v102
    %v107 = vpack.c.bf16 %v105, %v103
    %v108 = vld [vmem:[#allocation5] sm:$0xf]
    %v109 = vld [vmem:[#allocation5 + $0x4] sm:$0xf]
    %v110 = vld [vmem:[#allocation5 + $0x8] sm:$0xf]
    %v111 = vld [vmem:[#allocation5 + $0xc] sm:$0xf]
    %v112 = vld [vmem:[#allocation5 + $0x10] sm:$0xf]
    %v113 = vld [vmem:[#allocation5 + $0x14] sm:$0xf]
    %v114 = vld [vmem:[#allocation5 + $0x18] sm:$0xf]
    %v115 = vld [vmem:[#allocation5 + $0x1c] sm:$0xf]
    %v116 = vld [vmem:[#allocation5 + $0x20] sm:$0xf]
    %v117 = vld [vmem:[#allocation5 + $0x24] sm:$0xf]
    %v118 = vld [vmem:[#allocation5 + $0x28] sm:$0xf]
    %v119 = vld [vmem:[#allocation5 + $0x2c] sm:$0xf]
    %v120 = vld [vmem:[#allocation5 + $0x30] sm:$0xf]
    %v121 = vld [vmem:[#allocation5 + $0x34] sm:$0xf]
    %v122 = vld [vmem:[#allocation5 + $0x38] sm:$0xf]
    %v123 = vld [vmem:[#allocation5 + $0x3c] sm:$0xf]
    %v124 = vld [vmem:[#allocation5 + $0x40] sm:$0xf]
    %v125 = vld [vmem:[#allocation5 + $0x44] sm:$0xf]
    %v126 = vld [vmem:[#allocation5 + $0x48] sm:$0xf]
    %v127 = vld [vmem:[#allocation5 + $0x4c] sm:$0xf]
    %v128 = vld [vmem:[#allocation5 + $0x50] sm:$0xf]
    %v129 = vld [vmem:[#allocation5 + $0x54] sm:$0xf]
    %v130 = vld [vmem:[#allocation5 + $0x58] sm:$0xf]
    %v131 = vld [vmem:[#allocation5 + $0x5c] sm:$0xf]
    %v132 = vld [vmem:[#allocation5 + $0x60] sm:$0xf]
    %v133 = vld [vmem:[#allocation5 + $0x64] sm:$0xf]
    %v134 = vld [vmem:[#allocation5 + $0x68] sm:$0xf]
    %v135 = vld [vmem:[#allocation5 + $0x6c] sm:$0xf]
    %v136 = vld [vmem:[#allocation5 + $0x70] sm:$0xf]
    %v137 = vld [vmem:[#allocation5 + $0x74] sm:$0xf]
    %v138 = vld [vmem:[#allocation5 + $0x78] sm:$0xf]
    %v139 = vld [vmem:[#allocation5 + $0x7c] sm:$0xf]
    %v140 = vld [vmem:[%s2] sm:$0x1]
    %v142 = vlaneseq
    %v143 = vshrl.u32 %v142, 7
    %v144 = vsub.s32 0, %v143
    %v145 = vrot.slane %v140, %v144
    %v179 = vunpack.c.l.b16 %v108
    %v180 = vunpack.c.l.b16 %v109
    %v181 = vunpack.c.l.b16 %v110
    %v182 = vunpack.c.l.b16 %v111
    %v183 = vunpack.c.l.b16 %v112
    %v184 = vunpack.c.l.b16 %v113
    %v185 = vunpack.c.l.b16 %v114
    %v186 = vunpack.c.l.b16 %v115
    %v187 = vunpack.c.l.b16 %v116
    %v188 = vunpack.c.l.b16 %v117
    %v189 = vunpack.c.l.b16 %v118
    %v190 = vunpack.c.l.b16 %v119
    %v191 = vunpack.c.l.b16 %v120
    %v192 = vunpack.c.l.b16 %v121
    %v193 = vunpack.c.l.b16 %v122
    %v194 = vunpack.c.l.b16 %v123
    %v195 = vunpack.c.l.b16 %v124
    %v196 = vunpack.c.l.b16 %v125
    %v197 = vunpack.c.l.b16 %v126
    %v198 = vunpack.c.l.b16 %v127
    %v199 = vunpack.c.l.b16 %v128
    %v200 = vunpack.c.l.b16 %v129
    %v201 = vunpack.c.l.b16 %v130
    %v202 = vunpack.c.l.b16 %v131
    %v203 = vunpack.c.l.b16 %v132
    %v204 = vunpack.c.l.b16 %v133
    %v205 = vunpack.c.l.b16 %v134
    %v206 = vunpack.c.l.b16 %v135
    %v207 = vunpack.c.l.b16 %v136
    %v208 = vunpack.c.l.b16 %v137
    %v209 = vunpack.c.l.b16 %v138
    %v210 = vunpack.c.l.b16 %v139
    %v211 = vpack.c.b16 %v180, %v179
    %v212 = vpack.c.b16 %v182, %v181
    %v213 = vpack.c.b16 %v184, %v183
    %v214 = vpack.c.b16 %v186, %v185
    %v215 = vpack.c.b16 %v188, %v187
    %v216 = vpack.c.b16 %v190, %v189
    %v217 = vpack.c.b16 %v192, %v191
    %v218 = vpack.c.b16 %v194, %v193
    %v219 = vpack.c.b16 %v196, %v195
    %v220 = vpack.c.b16 %v198, %v197
    %v221 = vpack.c.b16 %v200, %v199
    %v222 = vpack.c.b16 %v202, %v201
    %v223 = vpack.c.b16 %v204, %v203
    %v224 = vpack.c.b16 %v206, %v205
    %v225 = vpack.c.b16 %v208, %v207
    %v226 = vpack.c.b16 %v210, %v209
    %243 = vmatprep.subr.bf16.mxu0 0
    %244 = vmatpush1.bf16.msra.mxu0 %v211
    %245 = vmatprep.subr.bf16.mxu0 0
    %246 = vmatpush1.bf16.msra.mxu0 %v212
    %247 = vmatprep.subr.bf16.mxu0 0
    %248 = vmatpush1.bf16.msra.mxu0 %v213
    %249 = vmatprep.subr.bf16.mxu0 0
    %250 = vmatpush1.bf16.msra.mxu0 %v214
    %251 = vmatprep.subr.bf16.mxu0 0
    %252 = vmatpush1.bf16.msra.mxu0 %v215
    %253 = vmatprep.subr.bf16.mxu0 0
    %254 = vmatpush1.bf16.msra.mxu0 %v216
    %255 = vmatprep.subr.bf16.mxu0 0
    %256 = vmatpush1.bf16.msra.mxu0 %v217
    %257 = vmatprep.subr.bf16.mxu0 0
    %258 = vmatpush1.bf16.msra.mxu0 %v218
    %259 = vmatprep.subr.bf16.mxu0 0
    %260 = vmatpush1.bf16.msra.mxu0 %v219
    %261 = vmatprep.subr.bf16.mxu0 0
    %262 = vmatpush1.bf16.msra.mxu0 %v220
    %263 = vmatprep.subr.bf16.mxu0 0
    %264 = vmatpush1.bf16.msra.mxu0 %v221
    %265 = vmatprep.subr.bf16.mxu0 0
    %266 = vmatpush1.bf16.msra.mxu0 %v222
    %267 = vmatprep.subr.bf16.mxu0 0
    %268 = vmatpush1.bf16.msra.mxu0 %v223
    %269 = vmatprep.subr.bf16.mxu0 0
    %270 = vmatpush1.bf16.msra.mxu0 %v224
    %271 = vmatprep.subr.bf16.mxu0 0
    %272 = vmatpush1.bf16.msra.mxu0 %v225
    %273 = vmatprep.subr.bf16.mxu0 0
    %274 = vmatpush1.bf16.msra.mxu0 %v226
    %275 = vmatprep.mubr.bf16.mxu0 %v107
    %276 = vmatmul.mubr.bf16.gmra.mrb[0].mxu0 %v106
    %v277 = vpop.f32.mrb[0].mxu0
    %v278 = vadd.f32 %v145, %v277
    %v279 = vpop.f32.mrb[0].mxu0
    %v280 = vpop.f32.mrb[0].mxu0
    %v281 = vadd.f32 %v145, %v280
    %v282 = vpop.f32.mrb[0].mxu0
    %283 = vdwg.mxu0
    %v284 = vmax.f32 %v278, 0.0
    %v285 = vmax.f32 %v281, 0.0
    %v286 = vpack.c.bf16 %v285, %v284
    %v287 = vld [vmem:[#allocation7] sm:$0xf]
    %v288 = vld [vmem:[#allocation7 + $0x4] sm:$0xf]
    %v289 = vld [vmem:[#allocation7 + $0x8] sm:$0xf]
    %v290 = vld [vmem:[#allocation7 + $0xc] sm:$0xf]
    %v291 = vld [vmem:[#allocation7 + $0x10] sm:$0xf]
    %v292 = vld [vmem:[#allocation7 + $0x14] sm:$0xf]
    %v293 = vld [vmem:[#allocation7 + $0x18] sm:$0xf]
    %v294 = vld [vmem:[#allocation7 + $0x1c] sm:$0xf]
    %v295 = vld [vmem:[#allocation7 + $0x20] sm:$0xf]
    %v296 = vld [vmem:[#allocation7 + $0x24] sm:$0xf]
    %v297 = vld [vmem:[#allocation7 + $0x28] sm:$0xf]
    %v298 = vld [vmem:[#allocation7 + $0x2c] sm:$0xf]
    %v299 = vld [vmem:[#allocation7 + $0x30] sm:$0xf]
    %v300 = vld [vmem:[#allocation7 + $0x34] sm:$0xf]
    %v301 = vld [vmem:[#allocation7 + $0x38] sm:$0xf]
    %v302 = vld [vmem:[#allocation7 + $0x3c] sm:$0xf]
    %v303 = vld [vmem:[%s4] sm:$0x1]
    %v305 = vlaneseq
    %v306 = vshrl.u32 %v305, 7
    %v307 = vsub.s32 0, %v306
    %v308 = vrot.slane %v303, %v307
    %v326 = vunpack.c.l.b16 %v287
    %v327 = vunpack.c.l.b16 %v288
    %v328 = vunpack.c.l.b16 %v289
    %v329 = vunpack.c.l.b16 %v290
    %v330 = vunpack.c.l.b16 %v291
    %v331 = vunpack.c.l.b16 %v292
    %v332 = vunpack.c.l.b16 %v293
    %v333 = vunpack.c.l.b16 %v294
    %v334 = vunpack.c.l.b16 %v295
    %v335 = vunpack.c.l.b16 %v296
    %v336 = vunpack.c.l.b16 %v297
    %v337 = vunpack.c.l.b16 %v298
    %v338 = vunpack.c.l.b16 %v299
    %v339 = vunpack.c.l.b16 %v300
    %v340 = vunpack.c.l.b16 %v301
    %v341 = vunpack.c.l.b16 %v302
    %v342 = vpack.c.b16 %v327, %v326
    %v343 = vpack.c.b16 %v329, %v328
    %v344 = vpack.c.b16 %v331, %v330
    %v345 = vpack.c.b16 %v333, %v332
    %v346 = vpack.c.b16 %v335, %v334
    %v347 = vpack.c.b16 %v337, %v336
    %v348 = vpack.c.b16 %v339, %v338
    %v349 = vpack.c.b16 %v341, %v340
    %358 = vmatprep.subr.bf16.mxu0 0
    %359 = vmatpush1.bf16.msra.mxu0 %v342
    %360 = vmatprep.subr.bf16.mxu0 0
    %361 = vmatpush1.bf16.msra.mxu0 %v343
    %362 = vmatprep.subr.bf16.mxu0 0
    %363 = vmatpush1.bf16.msra.mxu0 %v344
    %364 = vmatprep.subr.bf16.mxu0 0
    %365 = vmatpush1.bf16.msra.mxu0 %v345
    %366 = vmatprep.subr.bf16.mxu0 0
    %367 = vmatpush1.bf16.msra.mxu0 %v346
    %368 = vmatprep.subr.bf16.mxu0 0
    %369 = vmatpush1.bf16.msra.mxu0 %v347
    %370 = vmatprep.subr.bf16.mxu0 0
    %371 = vmatpush1.bf16.msra.mxu0 %v348
    %372 = vmatprep.subr.bf16.mxu0 0
    %373 = vmatpush1.bf16.msra.mxu0 %v349
    %374 = vmatprep.subr.bf16.mxu0 0
    %375 = vmatpush1.bf16.msra.mxu0 0
    %376 = vmatprep.subr.bf16.mxu0 0
    %377 = vmatpush1.bf16.msra.mxu0 0
    %378 = vmatprep.subr.bf16.mxu0 0
    %379 = vmatpush1.bf16.msra.mxu0 0
    %380 = vmatprep.subr.bf16.mxu0 0
    %381 = vmatpush1.bf16.msra.mxu0 0
    %382 = vmatprep.subr.bf16.mxu0 0
    %383 = vmatpush1.bf16.msra.mxu0 0
    %384 = vmatprep.subr.bf16.mxu0 0
    %385 = vmatpush1.bf16.msra.mxu0 0
    %386 = vmatprep.subr.bf16.mxu0 0
    %387 = vmatpush1.bf16.msra.mxu0 0
    %388 = vmatprep.subr.bf16.mxu0 0
    %389 = vmatpush1.bf16.msra.mxu0 0
    %390 = vmatprep.mubr.bf16.mxu0 0
    %391 = vmatmul.mubr.bf16.gmra.mrb[0].mxu0 %v286
    %v392 = vpop.f32.mrb[0].mxu0
    %v393 = vadd.f32 %v308, %v392
    %v394 = vpop.f32.mrb[0].mxu0
    %v395 = vpop.f32.mrb[0].mxu0
    %v396 = vadd.f32 %v308, %v395
    %v397 = vpop.f32.mrb[0].mxu0
    %398 = vdwg.mxu0
    %v399 = vmax.f32 %v393, 0.0
    %v400 = vmax.f32 %v396, 0.0
    %v401 = vpack.c.bf16 %v400, %v399
    %v402 = vld [vmem:[#allocation8] sm:$0xf]
    %v403 = vld [vmem:[#allocation8 + $0x4] sm:$0xf]
    %v404 = vld [vmem:[#allocation8 + $0x8] sm:$0xf]
    %v405 = vld [vmem:[#allocation8 + $0xc] sm:$0xf]
    %v406 = vld [vmem:[#allocation8 + $0x10] sm:$0xf]
    %v407 = vld [vmem:[#allocation8 + $0x14] sm:$0xf]
    %v408 = vld [vmem:[#allocation8 + $0x18] sm:$0xf]
    %v409 = vld [vmem:[#allocation8 + $0x1c] sm:$0xf]
    %v410 = vld [vmem:[#allocation8 + $0x20] sm:$0xf]
    %v411 = vld [vmem:[#allocation8 + $0x24] sm:$0xf]
    %v412 = vld [vmem:[#allocation8 + $0x28] sm:$0xf]
    %v413 = vld [vmem:[#allocation8 + $0x2c] sm:$0xf]
    %v414 = vld [vmem:[#allocation8 + $0x30] sm:$0xf]
    %v415 = vld [vmem:[#allocation8 + $0x34] sm:$0xf]
    %v416 = vld [vmem:[#allocation8 + $0x38] sm:$0xf]
    %v417 = vld [vmem:[#allocation8 + $0x3c] sm:$0xf]
    %v418 = vld [vmem:[%s6] sm:$0x1]
    %v420 = vlaneseq
    %v421 = vshrl.u32 %v420, 7
    %v422 = vsub.s32 0, %v421
    %v423 = vrot.slane %v418, %v422
    %v441 = vunpack.c.l.b16 %v402
    %v442 = vunpack.c.l.b16 %v403
    %v443 = vunpack.c.l.b16 %v404
    %v444 = vunpack.c.l.b16 %v405
    %v445 = vunpack.c.l.b16 %v406
    %v446 = vunpack.c.l.b16 %v407
    %v447 = vunpack.c.l.b16 %v408
    %v448 = vunpack.c.l.b16 %v409
    %v449 = vunpack.c.l.b16 %v410
    %v450 = vunpack.c.l.b16 %v411
    %v451 = vunpack.c.l.b16 %v412
    %v452 = vunpack.c.l.b16 %v413
    %v453 = vunpack.c.l.b16 %v414
    %v454 = vunpack.c.l.b16 %v415
    %v455 = vunpack.c.l.b16 %v416
    %v456 = vunpack.c.l.b16 %v417
    %v457 = vpack.c.b16 %v442, %v441
    %v458 = vpack.c.b16 %v444, %v443
    %v459 = vpack.c.b16 %v446, %v445
    %v460 = vpack.c.b16 %v448, %v447
    %v461 = vpack.c.b16 %v450, %v449
    %v462 = vpack.c.b16 %v452, %v451
    %v463 = vpack.c.b16 %v454, %v453
    %v464 = vpack.c.b16 %v456, %v455
    %473 = vmatprep.subr.bf16.mxu0 0
    %474 = vmatpush1.bf16.msra.mxu0 %v457
    %475 = vmatprep.subr.bf16.mxu0 0
    %476 = vmatpush1.bf16.msra.mxu0 %v458
    %477 = vmatprep.subr.bf16.mxu0 0
    %478 = vmatpush1.bf16.msra.mxu0 %v459
    %479 = vmatprep.subr.bf16.mxu0 0
    %480 = vmatpush1.bf16.msra.mxu0 %v460
    %481 = vmatprep.subr.bf16.mxu0 0
    %482 = vmatpush1.bf16.msra.mxu0 %v461
    %483 = vmatprep.subr.bf16.mxu0 0
    %484 = vmatpush1.bf16.msra.mxu0 %v462
    %485 = vmatprep.subr.bf16.mxu0 0
    %486 = vmatpush1.bf16.msra.mxu0 %v463
    %487 = vmatprep.subr.bf16.mxu0 0
    %488 = vmatpush1.bf16.msra.mxu0 %v464
    %489 = vmatprep.subr.bf16.mxu0 0
    %490 = vmatpush1.bf16.msra.mxu0 0
    %491 = vmatprep.subr.bf16.mxu0 0
    %492 = vmatpush1.bf16.msra.mxu0 0
    %493 = vmatprep.subr.bf16.mxu0 0
    %494 = vmatpush1.bf16.msra.mxu0 0
    %495 = vmatprep.subr.bf16.mxu0 0
    %496 = vmatpush1.bf16.msra.mxu0 0
    %497 = vmatprep.subr.bf16.mxu0 0
    %498 = vmatpush1.bf16.msra.mxu0 0
    %499 = vmatprep.subr.bf16.mxu0 0
    %500 = vmatpush1.bf16.msra.mxu0 0
    %501 = vmatprep.subr.bf16.mxu0 0
    %502 = vmatpush1.bf16.msra.mxu0 0
    %503 = vmatprep.subr.bf16.mxu0 0
    %504 = vmatpush1.bf16.msra.mxu0 0
    %505 = vmatprep.mubr.bf16.mxu0 0
    %506 = vmatmul.mubr.bf16.gmra.mrb[0].mxu0 %v401
    %v507 = vpop.f32.mrb[0].mxu0
    %v508 = vadd.f32 %v423, %v507
    %v509 = vpop.f32.mrb[0].mxu0
    %v510 = vpop.f32.mrb[0].mxu0
    %v511 = vadd.f32 %v423, %v510
    %v512 = vpop.f32.mrb[0].mxu0
    %513 = vdwg.mxu0
    %v514 = vmax.f32 %v508, 0.0
    %v515 = vmax.f32 %v511, 0.0
    %v516 = vpack.c.bf16 %v515, %v514
    %v517 = vld [vmem:[#allocation10] sm:$0xff]
    %v518 = vld [vmem:[#allocation10 + $0x8] sm:$0xff]
    %v519 = vld [vmem:[#allocation10 + $0x10] sm:$0xff]
    %v520 = vld [vmem:[#allocation10 + $0x18] sm:$0xff]
    %v521 = vld [vmem:[#allocation10 + $0x20] sm:$0xff]
    %v522 = vld [vmem:[#allocation10 + $0x28] sm:$0xff]
    %v523 = vld [vmem:[#allocation10 + $0x30] sm:$0xff]
    %v524 = vld [vmem:[#allocation10 + $0x38] sm:$0xff]
    %v525 = vld [vmem:[#allocation10 + $0x40] sm:$0xff]
    %v526 = vld [vmem:[#allocation10 + $0x48] sm:$0xff]
    %v527 = vld [vmem:[#allocation10 + $0x50] sm:$0xff]
    %v528 = vld [vmem:[#allocation10 + $0x58] sm:$0xff]
    %v529 = vld [vmem:[#allocation10 + $0x60] sm:$0xff]
    %v530 = vld [vmem:[#allocation10 + $0x68] sm:$0xff]
    %v531 = vld [vmem:[#allocation10 + $0x70] sm:$0xff]
    %v532 = vld [vmem:[#allocation10 + $0x78] sm:$0xff]
    %v533 = vld [vmem:[%s8] sm:$0x3]
    %v535 = vlaneseq
    %v536 = vshrl.u32 %v535, 7
    %v537 = vsub.s32 0, %v536
    %v538 = vrot.slane %v533, %v537
    %v539 = vlaneseq
    %v540 = vshrl.u32 %v539, 7
    %v541 = vsub.s32 1, %v540
    %v542 = vrot.slane %v533, %v541
    %v561 = vunpack.c.l.b16 %v517
    %v562 = vunpack.c.h.b16 %v517
    %v563 = vunpack.c.l.b16 %v518
    %v564 = vunpack.c.h.b16 %v518
    %v565 = vunpack.c.l.b16 %v519
    %v566 = vunpack.c.h.b16 %v519
    %v567 = vunpack.c.l.b16 %v520
    %v568 = vunpack.c.h.b16 %v520
    %v569 = vunpack.c.l.b16 %v521
    %v570 = vunpack.c.h.b16 %v521
    %v571 = vunpack.c.l.b16 %v522
    %v572 = vunpack.c.h.b16 %v522
    %v573 = vunpack.c.l.b16 %v523
    %v574 = vunpack.c.h.b16 %v523
    %v575 = vunpack.c.l.b16 %v524
    %v576 = vunpack.c.h.b16 %v524
    %v577 = vunpack.c.l.b16 %v525
    %v578 = vunpack.c.h.b16 %v525
    %v579 = vunpack.c.l.b16 %v526
    %v580 = vunpack.c.h.b16 %v526
    %v581 = vunpack.c.l.b16 %v527
    %v582 = vunpack.c.h.b16 %v527
    %v583 = vunpack.c.l.b16 %v528
    %v584 = vunpack.c.h.b16 %v528
    %v585 = vunpack.c.l.b16 %v529
    %v586 = vunpack.c.h.b16 %v529
    %v587 = vunpack.c.l.b16 %v530
    %v588 = vunpack.c.h.b16 %v530
    %v589 = vunpack.c.l.b16 %v531
    %v590 = vunpack.c.h.b16 %v531
    %v591 = vunpack.c.l.b16 %v532
    %v592 = vunpack.c.h.b16 %v532
    %v593 = vpack.c.b16 %v563, %v561
    %v594 = vpack.c.b16 %v564, %v562
    %v595 = vpack.c.b16 %v567, %v565
    %v596 = vpack.c.b16 %v568, %v566
    %v597 = vpack.c.b16 %v571, %v569
    %v598 = vpack.c.b16 %v572, %v570
    %v599 = vpack.c.b16 %v575, %v573
    %v600 = vpack.c.b16 %v576, %v574
    %v601 = vpack.c.b16 %v579, %v577
    %v602 = vpack.c.b16 %v580, %v578
    %v603 = vpack.c.b16 %v583, %v581
    %v604 = vpack.c.b16 %v584, %v582
    %v605 = vpack.c.b16 %v587, %v585
    %v606 = vpack.c.b16 %v588, %v586
    %v607 = vpack.c.b16 %v591, %v589
    %v608 = vpack.c.b16 %v592, %v590
    %625 = vmatprep.subr.bf16.mxu0 %v594
    %626 = vmatpush1.bf16.msra.mxu0 %v593
    %627 = vmatprep.subr.bf16.mxu0 %v596
    %628 = vmatpush1.bf16.msra.mxu0 %v595
    %629 = vmatprep.subr.bf16.mxu0 %v598
    %630 = vmatpush1.bf16.msra.mxu0 %v597
    %631 = vmatprep.subr.bf16.mxu0 %v600
    %632 = vmatpush1.bf16.msra.mxu0 %v599
    %633 = vmatprep.subr.bf16.mxu0 %v602
    %634 = vmatpush1.bf16.msra.mxu0 %v601
    %635 = vmatprep.subr.bf16.mxu0 %v604
    %636 = vmatpush1.bf16.msra.mxu0 %v603
    %637 = vmatprep.subr.bf16.mxu0 %v606
    %638 = vmatpush1.bf16.msra.mxu0 %v605
    %639 = vmatprep.subr.bf16.mxu0 %v608
    %640 = vmatpush1.bf16.msra.mxu0 %v607
    %641 = vmatprep.subr.bf16.mxu0 0
    %642 = vmatpush1.bf16.msra.mxu0 0
    %643 = vmatprep.subr.bf16.mxu0 0
    %644 = vmatpush1.bf16.msra.mxu0 0
    %645 = vmatprep.subr.bf16.mxu0 0
    %646 = vmatpush1.bf16.msra.mxu0 0
    %647 = vmatprep.subr.bf16.mxu0 0
    %648 = vmatpush1.bf16.msra.mxu0 0
    %649 = vmatprep.subr.bf16.mxu0 0
    %650 = vmatpush1.bf16.msra.mxu0 0
    %651 = vmatprep.subr.bf16.mxu0 0
    %652 = vmatpush1.bf16.msra.mxu0 0
    %653 = vmatprep.subr.bf16.mxu0 0
    %654 = vmatpush1.bf16.msra.mxu0 0
    %655 = vmatprep.subr.bf16.mxu0 0
    %656 = vmatpush1.bf16.msra.mxu0 0
    %657 = vmatprep.mubr.bf16.mxu0 0
    %658 = vmatmul.mubr.bf16.gmra.mrb[0].mxu0 %v516
    %v659 = vpop.f32.mrb[0].mxu0
    %v660 = vadd.f32 %v538, %v659
    %v661 = vpop.f32.mrb[0].mxu0
    %v662 = vadd.f32 %v542, %v661
    %v663 = vpop.f32.mrb[0].mxu0
    %v664 = vadd.f32 %v538, %v663
    %v665 = vpop.f32.mrb[0].mxu0
    %v666 = vadd.f32 %v542, %v665
    %667 = vdwg.mxu0
    %v668 = vmax.f32 %v660, 0.0
    %v669 = vmax.f32 %v662, 0.0
    %v670 = vmax.f32 %v664, 0.0
    %v671 = vmax.f32 %v666, 0.0
    %672 = vst [vmem:[#allocation11] sm:$0xff] %v668
    %673 = vst [vmem:[#allocation11 + $0x8] sm:$0xff] %v669
    %674 = vst [vmem:[#allocation11 + $0x10] sm:$0xff] %v670
    %675 = vst [vmem:[#allocation11 + $0x18] sm:$0xff] %v671
    // Predicated region
    $region58: #{autoencoder_forward.1} parent=1 // pred_check
      _
    $region59: #{autoencoder_forward.1} parent=1 // pred_check_branch
      %677 = sbr.rel (0) target = $region61
    $region60: #{autoencoder_forward.1} parent=1 // pred_region
      %s679 = ssub.s32 512, 512
      %680 = vsyncadd [#allocation4], %s679
      %s681 = sshll.u32 [#allocation11], 4
      %s682 = int_to_ptr.vmem [resolvable:$true] %s681
      %687 = dma.vmem_to_hbm [thread:$0]  %s682, 512, %s9, [#allocation4], 256, 256, 16
    $region61: #{autoencoder_forward.1} parent=1 // pred_fallthru
      _
    // Predicated region
    $region62: #{autoencoder_forward.1} parent=1 // pred_check
      _
    $region63: #{autoencoder_forward.1} parent=1 // pred_check_branch
      %689 = sbr.rel (0) target = $region65
    $region64: #{autoencoder_forward.1} parent=1 // pred_region
      %690 = dma.done [#allocation4], 512
    $region65: #{autoencoder_forward.1} parent=1 // pred_fallthru
      _
    %691 = vsyncpa [#allocation3], 1
    %692 = vsyncpa [#allocation6], 1
    %693 = vsyncpa [#allocation9], 1
    %694 = vsyncpa [#allocation4], 1

</llo_original>
